<compile_context>
chip_gen: v7x
topology: tpu7x:2x2x1
jax: 0.10.0
libtpu: 0.0.40
codegen_flags: <defaults>
</compile_context>

<pallas_src>
import functools

import jax
import jax.numpy as jnp
from jax.experimental import pallas as pl
from jax.experimental.pallas import tpu as pltpu

_COS_EPS = 1e-8  # torch.nn.functional.cosine_similarity default eps


def _round_up(x, m):
    return ((x + m - 1) // m) * m


def _choose_batch_tile(B, D, L, itemsize_x, itemsize_mu):
    """Pick batch tile TB from a per-step VMEM byte target (not a row cap)."""
    min_item = min(itemsize_x, itemsize_mu)
    sub = max(8, 32 // min_item)          # sublane packing: 8 f32 / 16 bf16 / 32 8-bit
    d_pad = _round_up(D, 128)
    l_pad = _round_up(L, 128)
    # Lane-padded VMEM bytes of one pipeline buffer of all four input tiles, per row.
    row_bytes = 2 * d_pad * itemsize_x + 2 * l_pad * itemsize_mu
    target_step_bytes = 4 * 1024 * 1024   # ~4 MiB/buffer keeps the DMA pipeline at HBM roofline
    tb = target_step_bytes // max(row_bytes, 1)
    tb = max(sub, min(tb, 8192))
    tb = (tb // sub) * sub
    tb = min(tb, _round_up(B, sub))       # never larger than the sublane-rounded batch
    return max(tb, sub)


@functools.partial(jax.jit, static_argnames=("block_rows",))
def _custom_loss_impl(inp, target, mu, logvar, *, block_rows=None):
    B, D = inp.shape
    _, L = mu.shape

    if block_rows is None:
        tb = _choose_batch_tile(B, D, L, inp.dtype.itemsize, mu.dtype.itemsize)
    else:
        tb = int(block_rows)
    num_tiles = pl.cdiv(B, tb)

    def kernel(x_ref, t_ref, mu_ref, lv_ref, cos_ref, klp_ref):
        # --- per-row cosine-similarity loss (1 - cos) ---------------------
        x = x_ref[...].astype(jnp.float32)
        t = t_ref[...].astype(jnp.float32)
        dot = jnp.sum(x * t, axis=1, keepdims=True)            # [TB, 1]
        nx = jnp.sqrt(jnp.sum(x * x, axis=1, keepdims=True))   # sqrt before multiply:
        nt = jnp.sqrt(jnp.sum(t * t, axis=1, keepdims=True))   # no overflow of |x|^2*|t|^2
        # torch semantics: cos = dot / max(|x|*|t|, eps)  (product clamp)
        cos_ref[...] = 1.0 - dot / jnp.maximum(nx * nt, _COS_EPS)

        # --- KL partial for this batch tile (single fused reduction) ------
        mu_v = mu_ref[...].astype(jnp.float32)
        lv_v = lv_ref[...].astype(jnp.float32)
        kl_elem = 1.0 + lv_v - mu_v * mu_v - jnp.exp(lv_v)      # [TB, L]
        if B % tb != 0:
            # Ragged last tile: rows >= B hold unspecified data; select to 0.
            # (B and tb are static, so this branch is only traced when needed.)
            row = jax.lax.broadcasted_iota(jnp.int32, kl_elem.shape, 0)
            valid = (row + pl.program_id(0) * tb) < B
            kl_elem = jnp.where(valid, kl_elem, 0.0)
        kl_partial = -0.5 * jnp.sum(kl_elem)
        # One (8,128)-aligned block per grid step keeps the batch axis fully
        # parallel (no resident accumulator) without sub-tile output blocks.
        klp_ref[...] = jnp.full(klp_ref.shape, kl_partial, dtype=jnp.float32)

    in_bytes = ((inp.size + target.size) * inp.dtype.itemsize
                + (mu.size + logvar.size) * mu.dtype.itemsize)
    out_bytes = B * 4 + num_tiles * 8 * 128 * 4
    cost = pl.CostEstimate(
        flops=8 * B * D + 5 * B * L,
        transcendentals=B * L + 3 * B,
        bytes_accessed=in_bytes + out_bytes,
    )

    cos_out, kl_parts = pl.pallas_call(
        kernel,
        out_shape=(
            jax.ShapeDtypeStruct((B, 1), jnp.float32),
            jax.ShapeDtypeStruct((num_tiles * 8, 128), jnp.float32),
        ),
        grid=(num_tiles,),
        in_specs=[
            pl.BlockSpec((tb, D), lambda i: (i, 0)),
            pl.BlockSpec((tb, D), lambda i: (i, 0)),
            pl.BlockSpec((tb, L), lambda i: (i, 0)),
            pl.BlockSpec((tb, L), lambda i: (i, 0)),
        ],
        out_specs=(
            pl.BlockSpec((tb, 1), lambda i: (i, 0)),
            pl.BlockSpec((8, 128), lambda i: (i, 0)),
        ),
        compiler_params=pltpu.CompilerParams(
            # Independent tiles -> both TensorCores can be used on v7x.
            dimension_semantics=("parallel",),
            # Consistent with the ~4 MiB/buffer tile budget; safe on v7x (64 MiB VMEM).
            vmem_limit_bytes=32 * 1024 * 1024,
        ),
        cost_estimate=cost,
    )(inp, target, mu, logvar)

    # kl_parts holds one broadcast partial per (8,128) tile block; take one value
    # per tile and reduce. Then broadcast the scalar KL onto the per-row cos loss.
    kl_total = jnp.sum(kl_parts[::8, 0])
    return cos_out[:, 0] + kl_total


def custom_loss(inp, target, mu, logvar, cols=None):
    """Pallas equivalent of CustomLoss.forward. Returns shape [B] float32."""
    del cols  # unused, kept for signature parity with the PyTorch module
    B, D = inp.shape
    Bl, L = mu.shape
    assert B == Bl and target.shape == (B, D) and logvar.shape == (B, L)
    return _custom_loss_impl(inp, target, mu, logvar)


def _reference(inp, target, mu, logvar):
    inp = inp.astype(jnp.float32)
    target = target.astype(jnp.float32)
    mu = mu.astype(jnp.float32)
    logvar = logvar.astype(jnp.float32)
    dot = jnp.sum(inp * target, axis=1)
    nx = jnp.linalg.norm(inp, axis=1)
    nt = jnp.linalg.norm(target, axis=1)
    cos = dot / jnp.maximum(nx * nt, _COS_EPS)   # torch product-clamp semantics
    kdl = -0.5 * jnp.sum(1.0 + logvar - mu**2 - jnp.exp(logvar))
    return (1.0 - cos) + kdl


if __name__ == "__main__":
    key = jax.random.PRNGKey(0)
    k1, k2, k3, k4 = jax.random.split(key, 4)

    # Small shapes consistent with the module: batch=8, features=32, latent=16.
    B, D, L = 8, 32, 16
    inp = jax.random.normal(k1, (B, D), dtype=jnp.float32)
    target = jax.random.normal(k2, (B, D), dtype=jnp.float32)
    mu = 0.1 * jax.random.normal(k3, (B, L), dtype=jnp.float32)
    logvar = 0.1 * jax.random.normal(k4, (B, L), dtype=jnp.float32)
    cols = jnp.arange(D)  # unused, present for signature parity

    out = jax.block_until_ready(custom_loss(inp, target, mu, logvar, cols))
    ref = _reference(inp, target, mu, logvar)
    assert out.shape == (B,)
    assert jnp.allclose(out, ref, rtol=1e-5, atol=1e-5), (out, ref)

    # Ragged-last-tile path: B not a multiple of the batch tile exercises the
    # in-kernel iota mask (no host-side padding anywhere).
    B2 = 24
    k5, k6, k7, k8 = jax.random.split(jax.random.PRNGKey(1), 4)
    inp2 = jax.random.normal(k5, (B2, D), dtype=jnp.float32)
    target2 = jax.random.normal(k6, (B2, D), dtype=jnp.float32)
    mu2 = 0.1 * jax.random.normal(k7, (B2, L), dtype=jnp.float32)
    logvar2 = 0.1 * jax.random.normal(k8, (B2, L), dtype=jnp.float32)
    out2 = jax.block_until_ready(
        _custom_loss_impl(inp2, target2, mu2, logvar2, block_rows=16))
    ref2 = _reference(inp2, target2, mu2, logvar2)
    assert out2.shape == (B2,)
    assert jnp.allclose(out2, ref2, rtol=1e-5, atol=1e-5), (out2, ref2)

    print("KERNEL_OK")
</pallas_src>

<mosaic_0001>
module attributes {stable_mosaic.version = 11 : i64} {
  func.func @kernel(%arg0: i32, %arg1: memref<8x32xf32, #tpu.memory_space<vmem>>, %arg2: memref<8x32xf32, #tpu.memory_space<vmem>>, %arg3: memref<8x16xf32, #tpu.memory_space<vmem>>, %arg4: memref<8x16xf32, #tpu.memory_space<vmem>>, %arg5: memref<8x1xf32, #tpu.memory_space<vmem>>, %arg6: memref<8x128xf32, #tpu.memory_space<vmem>>) attributes {dimension_semantics = [#tpu.dimension_semantics<parallel>], iteration_bounds = array<i64: 1>, scalar_prefetch = 0 : i64, scratch_operands = 0 : i64, tpu.core_type = #tpu.core_type<tc>, window_params = [{transform_indices = @transform_0, window_bounds = array<i64: 8, 32>}, {transform_indices = @transform_1, window_bounds = array<i64: 8, 32>}, {transform_indices = @transform_2, window_bounds = array<i64: 8, 16>}, {transform_indices = @transform_3, window_bounds = array<i64: 8, 16>}, {transform_indices = @transform_4, window_bounds = array<i64: 8, 1>}, {transform_indices = @transform_5, window_bounds = array<i64: 8, 128>}]} {
    %c0 = arith.constant 0 : index
    %c0_0 = arith.constant 0 : index
    %0 = vector.load %arg1[%c0, %c0_0] : memref<8x32xf32, #tpu.memory_space<vmem>>, vector<8x32xf32>
    %c0_1 = arith.constant 0 : index
    %c0_2 = arith.constant 0 : index
    %1 = vector.load %arg2[%c0_1, %c0_2] : memref<8x32xf32, #tpu.memory_space<vmem>>, vector<8x32xf32>
    %2 = arith.mulf %0, %1 : vector<8x32xf32>
    %cst = arith.constant dense<0.000000e+00> : vector<8xf32>
    %3 = vector.multi_reduction <add>, %2, %cst [1] : vector<8x32xf32> to vector<8xf32>
    %4 = vector.shape_cast %3 : vector<8xf32> to vector<8x1xf32>
    %5 = arith.mulf %0, %0 : vector<8x32xf32>
    %cst_3 = arith.constant dense<0.000000e+00> : vector<8xf32>
    %6 = vector.multi_reduction <add>, %5, %cst_3 [1] : vector<8x32xf32> to vector<8xf32>
    %7 = vector.shape_cast %6 : vector<8xf32> to vector<8x1xf32>
    %8 = math.sqrt %7 : vector<8x1xf32>
    %9 = arith.mulf %1, %1 : vector<8x32xf32>
    %cst_4 = arith.constant dense<0.000000e+00> : vector<8xf32>
    %10 = vector.multi_reduction <add>, %9, %cst_4 [1] : vector<8x32xf32> to vector<8xf32>
    %11 = vector.shape_cast %10 : vector<8xf32> to vector<8x1xf32>
    %12 = math.sqrt %11 : vector<8x1xf32>
    %13 = arith.mulf %8, %12 : vector<8x1xf32>
    %cst_5 = arith.constant 9.99999993E-9 : f32
    %14 = vector.broadcast %cst_5 : f32 to vector<8x1xf32>
    %15 = arith.maximumf %13, %14 : vector<8x1xf32>
    %16 = arith.divf %4, %15 : vector<8x1xf32>
    %cst_6 = arith.constant 1.000000e+00 : f32
    %17 = vector.broadcast %cst_6 : f32 to vector<8x1xf32>
    %18 = arith.subf %17, %16 : vector<8x1xf32>
    %c0_7 = arith.constant 0 : index
    %c0_8 = arith.constant 0 : index
    %19 = vector.load %arg5[%c0_7, %c0_8] : memref<8x1xf32, #tpu.memory_space<vmem>>, vector<8x1xf32>
    tpu.vector_store %arg5[%c0_7, %c0_8], %18 {strides = array<i32>} : memref<8x1xf32, #tpu.memory_space<vmem>>, vector<8x1xf32>,
    %c0_9 = arith.constant 0 : index
    %c0_10 = arith.constant 0 : index
    %20 = vector.load %arg3[%c0_9, %c0_10] : memref<8x16xf32, #tpu.memory_space<vmem>>, vector<8x16xf32>
    %c0_11 = arith.constant 0 : index
    %c0_12 = arith.constant 0 : index
    %21 = vector.load %arg4[%c0_11, %c0_12] : memref<8x16xf32, #tpu.memory_space<vmem>>, vector<8x16xf32>
    %cst_13 = arith.constant 1.000000e+00 : f32
    %22 = vector.broadcast %cst_13 : f32 to vector<8x16xf32>
    %23 = arith.addf %22, %21 : vector<8x16xf32>
    %24 = arith.mulf %20, %20 : vector<8x16xf32>
    %25 = arith.subf %23, %24 : vector<8x16xf32>
    %26 = math.exp %21 : vector<8x16xf32>
    %27 = arith.subf %25, %26 : vector<8x16xf32>
    %28 = vector.shape_cast %27 : vector<8x16xf32> to vector<1x8x16xf32>
    %cst_14 = arith.constant dense<0.000000e+00> : vector<1xf32>
    %29 = vector.multi_reduction <add>, %28, %cst_14 [1, 2] : vector<1x8x16xf32> to vector<1xf32>
    %30 = vector.shape_cast %29 : vector<1xf32> to vector<1x1x1xf32>
    %31 = vector.extract %30[0, 0, 0] : f32 from vector<1x1x1xf32>
    %cst_15 = arith.constant -5.000000e-01 : f32
    %32 = arith.mulf %cst_15, %31 : f32
    %33 = vector.broadcast %32 : f32 to vector<8x128xf32>
    %c0_16 = arith.constant 0 : index
    %c0_17 = arith.constant 0 : index
    %34 = vector.load %arg6[%c0_16, %c0_17] : memref<8x128xf32, #tpu.memory_space<vmem>>, vector<8x128xf32>
    tpu.vector_store %arg6[%c0_16, %c0_17], %33 {strides = array<i32>} : memref<8x128xf32, #tpu.memory_space<vmem>>, vector<8x128xf32>,
    return
  }
  func.func @transform_0(%arg0: i32) -> (i32, i32) {
    %c0_i32 = arith.constant 0 : i32
    %c0_i32_0 = arith.constant 0 : i32
    return %arg0, %c0_i32 : i32, i32
  }
  func.func @transform_1(%arg0: i32) -> (i32, i32) {
    %c0_i32 = arith.constant 0 : i32
    %c0_i32_0 = arith.constant 0 : i32
    return %arg0, %c0_i32 : i32, i32
  }
  func.func @transform_2(%arg0: i32) -> (i32, i32) {
    %c0_i32 = arith.constant 0 : i32
    %c0_i32_0 = arith.constant 0 : i32
    return %arg0, %c0_i32 : i32, i32
  }
  func.func @transform_3(%arg0: i32) -> (i32, i32) {
    %c0_i32 = arith.constant 0 : i32
    %c0_i32_0 = arith.constant 0 : i32
    return %arg0, %c0_i32 : i32, i32
  }
  func.func @transform_4(%arg0: i32) -> (i32, i32) {
    %c0_i32 = arith.constant 0 : i32
    %c0_i32_0 = arith.constant 0 : i32
    return %arg0, %c0_i32 : i32, i32
  }
  func.func @transform_5(%arg0: i32) -> (i32, i32) {
    %c0_i32 = arith.constant 0 : i32
    %c0_i32_0 = arith.constant 0 : i32
    return %arg0, %c0_i32 : i32, i32
  }
}

</mosaic_0001>

<llo_original>
// kernel: _custom_loss_impl.1
$region0: #{_custom_loss_impl.1}
  #allocation0 [shape = 'u32[]', space=smem, size = 0x4, offset = 0x4, fixed_abs, tag = 'smem constant byte address 0x4 - core index']
  #allocation1 [shape = 'u32[144,128]{1,0:T(1,128)}', space=vmem, size = 0x12000, scoped, tag = 'internal scratch']
  %s0 = inlined_call_operand.vmem [shape: f32[8,32], index: 0, kind: input, shape index: {}]
  %s1 = inlined_call_operand.hbm [shape: f32[8,32], index: 1, kind: input, shape index: {}]
  %s2 = inlined_call_operand.hbm [shape: f32[8,16], index: 2, kind: input, shape index: {}]
  %s3 = inlined_call_operand.hbm [shape: f32[8,16], index: 3, kind: input, shape index: {}]
  %s4 = inlined_call_operand.vmem [shape: f32[8,1], index: 4, kind: output, shape index: {0}]
  %s5 = inlined_call_operand.vmem [shape: f32[8,128], index: 5, kind: output, shape index: {1}]
  %6 = xla_tuple %s4, %s5
  %s7 = sld [smem:[#allocation0]]
  $region46: #{_custom_loss_impl.1} parent=0
    _
  %s9 = ssub.s32 1, %s7
  %s10 = scalar_select 0, %s9, %s7
  $region1: #{_custom_loss_impl.1} parent=0
    #allocation2 [shape = 'u8[4096]{0}', space=vmem, size = 0x1000, scoped, tag = 'input window, operand 1, single buffered']
    #allocation3 [shape = 's32[1]{0}', space=sflag, size = 0x4, scoped, tag = 'scoped memory for _custom_loss_impl.1']
    #allocation4 [shape = 'u8[4096]{0}', space=vmem, size = 0x1000, scoped, tag = 'input window, operand 2, single buffered']
    #allocation5 [shape = 's32[1]{0}', space=sflag, size = 0x4, scoped, tag = 'scoped memory for _custom_loss_impl.1']
    #allocation6 [shape = 'u8[4096]{0}', space=vmem, size = 0x1000, scoped, tag = 'input window, operand 3, single buffered']
    %11 = vsyncpa [#allocation3], 0
    %12 = vsyncpa [#allocation5], 0
    // Predicated region
    $region2: #{_custom_loss_impl.1} parent=1 // pred_check
      _
    $region3: #{_custom_loss_impl.1} parent=1 // pred_check_branch
      %14 = sbr.rel (0) target = $region5
    $region4: #{_custom_loss_impl.1} parent=1 // pred_region
      _
    $region5: #{_custom_loss_impl.1} parent=1 // pred_fallthru
      _
    // Predicated region
    $region6: #{_custom_loss_impl.1} parent=1 // pred_check
      _
    $region7: #{_custom_loss_impl.1} parent=1 // pred_check_branch
      %16 = sbr.rel (0) target = $region9
    $region8: #{_custom_loss_impl.1} parent=1 // pred_region
      %s18 = ssub.s32 128, 128
      %19 = vsyncadd [#allocation3], %s18
      %s21 = sshll.u32 [#allocation2], 4
      %s22 = int_to_ptr.vmem [resolvable:$true] %s21
      %24 = dma.hbm_to_vmem [thread:$0]  %s1, 128, %s22, [#allocation3]
    $region9: #{_custom_loss_impl.1} parent=1 // pred_fallthru
      _
    // Predicated region
    $region10: #{_custom_loss_impl.1} parent=1 // pred_check
      _
    $region11: #{_custom_loss_impl.1} parent=1 // pred_check_branch
      %26 = sbr.rel (0) target = $region13
    $region12: #{_custom_loss_impl.1} parent=1 // pred_region
      %s28 = ssub.s32 128, 128
      %29 = vsyncadd [#allocation5], %s28
      %s31 = sshll.u32 [#allocation4], 4
      %s32 = int_to_ptr.vmem [resolvable:$true] %s31
      %34 = dma.hbm_to_vmem [thread:$0]  %s2, 128, %s32, [#allocation5]
    $region13: #{_custom_loss_impl.1} parent=1 // pred_fallthru
      _
    // Predicated region
    $region14: #{_custom_loss_impl.1} parent=1 // pred_check
      _
    $region15: #{_custom_loss_impl.1} parent=1 // pred_check_branch
      %36 = sbr.rel (0) target = $region17
    $region16: #{_custom_loss_impl.1} parent=1 // pred_region
      %s38 = ssub.s32 128, 128
      %39 = vsyncadd [#allocation5], %s38
      %s41 = sshll.u32 [#allocation6], 4
      %s42 = int_to_ptr.vmem [resolvable:$true] %s41
      %44 = dma.hbm_to_vmem [thread:$0]  %s3, 128, %s42, [#allocation5]
    $region17: #{_custom_loss_impl.1} parent=1 // pred_fallthru
      _
    // Predicated region
    $region18: #{_custom_loss_impl.1} parent=1 // pred_check
      _
    $region19: #{_custom_loss_impl.1} parent=1 // pred_check_branch
      %46 = sbr.rel (0) target = $region21
    $region20: #{_custom_loss_impl.1} parent=1 // pred_region
      %47 = dma.done [#allocation3], 128
    $region21: #{_custom_loss_impl.1} parent=1 // pred_fallthru
      _
    // Predicated region
    $region22: #{_custom_loss_impl.1} parent=1 // pred_check
      _
    $region23: #{_custom_loss_impl.1} parent=1 // pred_check_branch
      %49 = sbr.rel (0) target = $region25
    $region24: #{_custom_loss_impl.1} parent=1 // pred_region
      %50 = dma.done [#allocation5], 128
    $region25: #{_custom_loss_impl.1} parent=1 // pred_fallthru
      _
    // Predicated region
    $region26: #{_custom_loss_impl.1} parent=1 // pred_check
      _
    $region27: #{_custom_loss_impl.1} parent=1 // pred_check_branch
      %52 = sbr.rel (0) target = $region29
    $region28: #{_custom_loss_impl.1} parent=1 // pred_region
      %53 = dma.done [#allocation5], 128
    $region29: #{_custom_loss_impl.1} parent=1 // pred_fallthru
      _
    %v54 = vld [vmem:[%s0] sm:$0xff]
    %v55 = vld [vmem:[#allocation2] sm:$0xff]
    %v56 = vmul.f32 %v54, %v55
    %vm57 = vcmask 261120
    %v58 = vsel %vm57, %v56, 0.0
    %59 = vadd.xlane.f32.xlu0 %v58
    %v60 = vpop.xlane.xlu0 %59
    %v61 = vmul.f32 %v54, %v54
    %v62 = vsel %vm57, %v61, 0.0
    %63 = vadd.xlane.f32.xlu0 %v62
    %v64 = vpop.xlane.xlu0 %63
    %v65 = vrsqrt.pop %v64
    %v66 = vmul.f32 %v64, %v65
    %vm67 = vcmp.eq.f32.partialorder %v64, inf
    %v68 = vsel %vm67, %v64, %v66
    %vm69 = vcmp.eq.f32.partialorder %v64, 0.0
    %v70 = vand.u32 %v64, 2147483648
    %v71 = vsel %vm69, %v70, %v68
    %v72 = vmul.f32 %v55, %v55
    %v73 = vsel %vm57, %v72, 0.0
    %74 = vadd.xlane.f32.xlu0 %v73
    %v75 = vpop.xlane.xlu0 %74
    %v76 = vrsqrt.pop %v75
    %v77 = vmul.f32 %v75, %v76
    %vm78 = vcmp.eq.f32.partialorder %v75, inf
    %v79 = vsel %vm78, %v75, %v77
    %vm80 = vcmp.eq.f32.partialorder %v75, 0.0
    %v81 = vand.u32 %v75, 2147483648
    %v82 = vsel %vm80, %v81, %v79
    %v83 = vmul.f32 %v71, %v82
    %v84 = vmax.f32 %v83, 1e-08
    %v85 = vrcp.pop %v84
    %v86 = vmul.f32 %v60, %v85
    %v87 = vsub.f32 1.0, %v86
    %vm88 = vcmask 7168
    %89 = vst.msk [vmem:[%s4] sm:$0xff] %vm88, %v87
    %v90 = vld [vmem:[#allocation4] sm:$0xff]
    %v91 = vld [vmem:[#allocation6] sm:$0xff]
    %v92 = vadd.f32 %v91, 1.0
    %v93 = vmul.f32 %v90, %v90
    %v94 = vsub.f32 %v92, %v93
    %v95 = vmul.f32 %v91, 1.442695
    %v96 = vpow.pop %v95
    %v97 = vsub.f32 %v94, %v96
    %vm98 = vcmask 130048
    %v99 = vsel %vm98, %v97, 0.0
    %100 = vadd.xlane.f32.xlu0 %v99
    %v101 = vpop.xlane.xlu0 %100
    %v102 = vrot.slane %v101, 4
    %v103 = vadd.f32 %v101, %v102
    %v104 = vrot.slane %v103, 2
    %v105 = vadd.f32 %v103, %v104
    %v106 = vrot.slane %v105, 1
    %v107 = vadd.f32 %v105, %v106
    %s108 = vtos %v107
    %s109 = smul.f32 %s108, -0.5
    %v110 = vstv %s109
    %111 = vst [vmem:[%s5] sm:$0xff] %v110
    // Predicated region
    $region30: #{_custom_loss_impl.1} parent=1 // pred_check
      _
    $region31: #{_custom_loss_impl.1} parent=1 // pred_check_branch
      %113 = sbr.rel (0) target = $region33
    $region32: #{_custom_loss_impl.1} parent=1 // pred_region
      _
    $region33: #{_custom_loss_impl.1} parent=1 // pred_fallthru
      _
    // Predicated region
    $region34: #{_custom_loss_impl.1} parent=1 // pred_check
      _
    $region35: #{_custom_loss_impl.1} parent=1 // pred_check_branch
      %115 = sbr.rel (0) target = $region37
    $region36: #{_custom_loss_impl.1} parent=1 // pred_region
      _
    $region37: #{_custom_loss_impl.1} parent=1 // pred_fallthru
      _
    // Predicated region
    $region38: #{_custom_loss_impl.1} parent=1 // pred_check
      _
    $region39: #{_custom_loss_impl.1} parent=1 // pred_check_branch
      %117 = sbr.rel (0) target = $region41
    $region40: #{_custom_loss_impl.1} parent=1 // pred_region
      _
    $region41: #{_custom_loss_impl.1} parent=1 // pred_fallthru
      _
    // Predicated region
    $region42: #{_custom_loss_impl.1} parent=1 // pred_check
      _
    $region43: #{_custom_loss_impl.1} parent=1 // pred_check_branch
      %119 = sbr.rel (0) target = $region45
    $region44: #{_custom_loss_impl.1} parent=1 // pred_region
      _
    $region45: #{_custom_loss_impl.1} parent=1 // pred_fallthru
      _
    %120 = vsyncpa [#allocation3], 1
    %121 = vsyncpa [#allocation5], 1

</llo_original>
